<compile_context>
chip_gen: v7x
topology: tpu7x:2x2x1
jax: 0.10.0
libtpu: 0.0.40
codegen_flags: <defaults>
</compile_context>

<pallas_src>
import jax
import jax.numpy as jnp
from jax.experimental import pallas as pl
from jax.experimental.pallas import tpu as pltpu


def _round_up(n, m):
    return ((n + m - 1) // m) * m


def _choose_tile_b(B, D, *, max_tile=2048, x_vmem_budget=8 << 20):
    """Pick the batch tile.

    - Big enough to amortize the ~0.35 us/grid-step fixed overhead.
    - 2 buffers x tile_b x D x 4 B (double-buffered f32 x tile) stays inside a
      budget that fits the smallest scoped-VMEM default (v5e: 16 MiB), so no
      vmem_limit_bytes override is needed on any generation.
    - When B spans multiple tiles, size them so the last tile is nearly full
      (no round-up waste) and keep >=2 grid steps so both v7x TensorCores
      receive work.
    """
    cap = max(8, ((x_vmem_budget // (2 * D * 4)) // 8) * 8)
    upper = min(max_tile, cap)
    if B <= min(upper, 1024):
        return _round_up(B, 8)            # single (nearly) full tile
    num_tiles = max(2, -(-B // upper))
    return min(upper, _round_up(-(-B // num_tiles), 8))


def mlp_kernel(x_ref, w1_ref, b1_ref, w2_ref, b2_ref, w3_ref, b3_ref, o_ref):
    # x arrives as f32 straight from HBM; cast to bf16 here, right before the
    # MXU (VPU has slack -- this kernel is memory-bound). All elementwise math
    # stays f32.
    x_bf = x_ref[...].astype(jnp.bfloat16)

    # fc1 + relu  (bf16 MXU operands, f32 accumulation)
    h1 = jnp.dot(x_bf, w1_ref[...], preferred_element_type=jnp.float32)
    h1 = jnp.maximum(h1 + b1_ref[...], 0.0)

    # fc2 + relu
    h2 = jnp.dot(h1.astype(jnp.bfloat16), w2_ref[...],
                 preferred_element_type=jnp.float32)
    h2 = jnp.maximum(h2 + b2_ref[...], 0.0)

    # fc3 (out_features == 1): VPU multiply + cross-lane (XLU) reduce instead
    # of a wasted N=1 MXU pass. w3_ref is a (1, 32) f32 row, b3_ref is (1, 1).
    z = jnp.sum(h2 * w3_ref[...], axis=-1, keepdims=True) + b3_ref[...]
    o_ref[...] = jax.nn.sigmoid(z)


def multi_dataset_model(x, params, *, tile_b=None):
    """x: (B, input_size) float32. params: (in,out) weights and (1,out) biases."""
    w1, b1 = params["w1"], params["b1"]
    w2, b2 = params["w2"], params["b2"]
    w3, b3 = params["w3"], params["b3"]
    B, D = x.shape
    H2 = w2.shape[1]          # 32

    # Weights are tiny; cast once (cache these in a real model). x stays f32
    # and is cast inside the kernel, so it is read from HBM exactly once.
    w1_bf = w1.astype(jnp.bfloat16)
    w2_bf = w2.astype(jnp.bfloat16)
    w3_row = w3.reshape(1, H2).astype(jnp.float32)
    b3_2d = b3.reshape(1, 1).astype(jnp.float32)

    if tile_b is None:
        tile_b = _choose_tile_b(B, D)
    # Ragged last tile: rows are independent and out-of-range output writes
    # are masked, so no padding pass and no wasted HBM traffic.
    grid = (pl.cdiv(B, tile_b),)

    def const_spec(a):
        return pl.BlockSpec(a.shape, lambda i: (0,) * a.ndim)

    out = pl.pallas_call(
        mlp_kernel,
        out_shape=jax.ShapeDtypeStruct((B, 1), jnp.float32),
        grid=grid,
        in_specs=[
            pl.BlockSpec((tile_b, D), lambda i: (i, 0)),   # x: tiled over batch
            const_spec(w1_bf), const_spec(b1),             # weights/biases stay
            const_spec(w2_bf), const_spec(b2),             # resident in VMEM
            const_spec(w3_row), const_spec(b3_2d),
        ],
        out_specs=pl.BlockSpec((tile_b, 1), lambda i: (i, 0)),
        compiler_params=pltpu.CompilerParams(
            dimension_semantics=("parallel",)),   # megacore-shard batch on v7x
    )(x, w1_bf, b1, w2_bf, b2, w3_row, b3_2d)

    return out


def init_params(key, input_size):
    """Deterministic init mimicking PyTorch Linear's U(-1/sqrt(fan_in), +1/sqrt(fan_in))."""
    def linear(key, fan_in, fan_out):
        kw, kb = jax.random.split(key)
        bound = 1.0 / jnp.sqrt(jnp.float32(fan_in))
        w = jax.random.uniform(kw, (fan_in, fan_out), jnp.float32, -bound, bound)
        b = jax.random.uniform(kb, (1, fan_out), jnp.float32, -bound, bound)
        return w, b

    k1, k2, k3 = jax.random.split(key, 3)
    w1, b1 = linear(k1, input_size, 64)
    w2, b2 = linear(k2, 64, 32)
    w3, b3 = linear(k3, 32, 1)
    return {"w1": w1, "b1": b1, "w2": w2, "b2": b2, "w3": w3, "b3": b3}


if __name__ == "__main__":
    key = jax.random.PRNGKey(0)
    k_x, k_p = jax.random.split(key)

    batch, input_size = 8, 32
    x = jax.random.normal(k_x, (batch, input_size), jnp.float32)
    params = init_params(k_p, input_size)

    out = jax.block_until_ready(multi_dataset_model(x, params))

    # Pure-JAX f32 reference (kernel uses bf16 MXU operands -> tolerance
    # scaled with sqrt(fan_in)).
    h1 = jnp.maximum(x @ params["w1"] + params["b1"], 0.0)
    h2 = jnp.maximum(h1 @ params["w2"] + params["b2"], 0.0)
    ref = jax.nn.sigmoid(h2 @ params["w3"] + params["b3"])
    assert out.shape == (batch, 1)
    tol = max(4e-3 * float(jnp.sqrt(jnp.float32(input_size))), 1e-2)
    assert jnp.allclose(out, ref, atol=tol), "mismatch vs reference"

    print("KERNEL_OK")
</pallas_src>

<mosaic_0001>
module attributes {stable_mosaic.version = 11 : i64} {
  func.func @mlp_kernel(%arg0: i32, %arg1: memref<8x32xf32, #tpu.memory_space<vmem>>, %arg2: memref<32x64xbf16, #tpu.memory_space<vmem>>, %arg3: memref<1x64xf32, #tpu.memory_space<vmem>>, %arg4: memref<64x32xbf16, #tpu.memory_space<vmem>>, %arg5: memref<1x32xf32, #tpu.memory_space<vmem>>, %arg6: memref<1x32xf32, #tpu.memory_space<vmem>>, %arg7: memref<1x1xf32, #tpu.memory_space<vmem>>, %arg8: memref<8x1xf32, #tpu.memory_space<vmem>>) attributes {dimension_semantics = [#tpu.dimension_semantics<parallel>], iteration_bounds = array<i64: 1>, scalar_prefetch = 0 : i64, scratch_operands = 0 : i64, tpu.core_type = #tpu.core_type<tc>, window_params = [{transform_indices = @transform_0, window_bounds = array<i64: 8, 32>}, {pipeline_mode = #tpu.pipeline_mode<synchronous>, transform_indices = @transform_1, window_bounds = array<i64: 32, 64>}, {pipeline_mode = #tpu.pipeline_mode<synchronous>, transform_indices = @transform_2, window_bounds = array<i64: 1, 64>}, {pipeline_mode = #tpu.pipeline_mode<synchronous>, transform_indices = @transform_3, window_bounds = array<i64: 64, 32>}, {pipeline_mode = #tpu.pipeline_mode<synchronous>, transform_indices = @transform_4, window_bounds = array<i64: 1, 32>}, {pipeline_mode = #tpu.pipeline_mode<synchronous>, transform_indices = @transform_5, window_bounds = array<i64: 1, 32>}, {pipeline_mode = #tpu.pipeline_mode<synchronous>, transform_indices = @transform_6, window_bounds = array<i64: 1, 1>}, {transform_indices = @transform_7, window_bounds = array<i64: 8, 1>}]} {
    %c0 = arith.constant 0 : index
    %c0_0 = arith.constant 0 : index
    %0 = vector.load %arg1[%c0, %c0_0] : memref<8x32xf32, #tpu.memory_space<vmem>>, vector<8x32xf32>
    %1 = arith.truncf %0 : vector<8x32xf32> to vector<8x32xbf16>
    %c0_1 = arith.constant 0 : index
    %c0_2 = arith.constant 0 : index
    %2 = vector.load %arg2[%c0_1, %c0_2] : memref<32x64xbf16, #tpu.memory_space<vmem>>, vector<32x64xbf16>
    %cst = arith.constant dense<0.000000e+00> : vector<8x64xf32>
    %3 = tpu.matmul %1, %2, %cst {dimension_numbers = #tpu.dot_dimension_numbers<[1], [0], [0], [1], [0, 0, 1, 1], [], []>} : vector<8x32xbf16>, vector<32x64xbf16>, vector<8x64xf32> -> vector<8x64xf32>
    %c0_3 = arith.constant 0 : index
    %c0_4 = arith.constant 0 : index
    %4 = vector.load %arg3[%c0_3, %c0_4] : memref<1x64xf32, #tpu.memory_space<vmem>>, vector<1x64xf32>
    %5 = vector.broadcast %4 : vector<1x64xf32> to vector<8x64xf32>
    %6 = arith.addf %3, %5 : vector<8x64xf32>
    %cst_5 = arith.constant 0.000000e+00 : f32
    %7 = vector.broadcast %cst_5 : f32 to vector<8x64xf32>
    %8 = arith.maximumf %6, %7 : vector<8x64xf32>
    %9 = arith.truncf %8 : vector<8x64xf32> to vector<8x64xbf16>
    %c0_6 = arith.constant 0 : index
    %c0_7 = arith.constant 0 : index
    %10 = vector.load %arg4[%c0_6, %c0_7] : memref<64x32xbf16, #tpu.memory_space<vmem>>, vector<64x32xbf16>
    %cst_8 = arith.constant dense<0.000000e+00> : vector<8x32xf32>
    %11 = tpu.matmul %9, %10, %cst_8 {dimension_numbers = #tpu.dot_dimension_numbers<[1], [0], [0], [1], [0, 0, 1, 1], [], []>} : vector<8x64xbf16>, vector<64x32xbf16>, vector<8x32xf32> -> vector<8x32xf32>
    %c0_9 = arith.constant 0 : index
    %c0_10 = arith.constant 0 : index
    %12 = vector.load %arg5[%c0_9, %c0_10] : memref<1x32xf32, #tpu.memory_space<vmem>>, vector<1x32xf32>
    %13 = vector.broadcast %12 : vector<1x32xf32> to vector<8x32xf32>
    %14 = arith.addf %11, %13 : vector<8x32xf32>
    %cst_11 = arith.constant 0.000000e+00 : f32
    %15 = vector.broadcast %cst_11 : f32 to vector<8x32xf32>
    %16 = arith.maximumf %14, %15 : vector<8x32xf32>
    %c0_12 = arith.constant 0 : index
    %c0_13 = arith.constant 0 : index
    %17 = vector.load %arg6[%c0_12, %c0_13] : memref<1x32xf32, #tpu.memory_space<vmem>>, vector<1x32xf32>
    %18 = vector.broadcast %17 : vector<1x32xf32> to vector<8x32xf32>
    %19 = arith.mulf %16, %18 : vector<8x32xf32>
    %cst_14 = arith.constant dense<0.000000e+00> : vector<8xf32>
    %20 = vector.multi_reduction <add>, %19, %cst_14 [1] : vector<8x32xf32> to vector<8xf32>
    %21 = vector.shape_cast %20 : vector<8xf32> to vector<8x1xf32>
    %c0_15 = arith.constant 0 : index
    %c0_16 = arith.constant 0 : index
    %22 = vector.load %arg7[%c0_15, %c0_16] : memref<1x1xf32, #tpu.memory_space<vmem>>, vector<1x1xf32>
    %23 = vector.broadcast %22 : vector<1x1xf32> to vector<8x1xf32>
    %24 = arith.addf %21, %23 : vector<8x1xf32>
    %25 = arith.negf %24 : vector<8x1xf32>
    %26 = math.exp %25 : vector<8x1xf32>
    %cst_17 = arith.constant 1.000000e+00 : f32
    %27 = vector.broadcast %cst_17 : f32 to vector<8x1xf32>
    %28 = arith.addf %27, %26 : vector<8x1xf32>
    %29 = arith.divf %27, %28 : vector<8x1xf32>
    %c0_18 = arith.constant 0 : index
    %c0_19 = arith.constant 0 : index
    %30 = vector.load %arg8[%c0_18, %c0_19] : memref<8x1xf32, #tpu.memory_space<vmem>>, vector<8x1xf32>
    tpu.vector_store %arg8[%c0_18, %c0_19], %29 {strides = array<i32>} : memref<8x1xf32, #tpu.memory_space<vmem>>, vector<8x1xf32>,
    return
  }
  func.func @transform_0(%arg0: i32) -> (i32, i32) {
    %c0_i32 = arith.constant 0 : i32
    %c0_i32_0 = arith.constant 0 : i32
    return %arg0, %c0_i32 : i32, i32
  }
  func.func @transform_1(%arg0: i32) -> (i32, i32) {
    %c0_i32 = arith.constant 0 : i32
    %c0_i32_0 = arith.constant 0 : i32
    %c0_i32_1 = arith.constant 0 : i32
    return %c0_i32, %c0_i32_0 : i32, i32
  }
  func.func @transform_2(%arg0: i32) -> (i32, i32) {
    %c0_i32 = arith.constant 0 : i32
    %c0_i32_0 = arith.constant 0 : i32
    %c0_i32_1 = arith.constant 0 : i32
    return %c0_i32, %c0_i32_0 : i32, i32
  }
  func.func @transform_3(%arg0: i32) -> (i32, i32) {
    %c0_i32 = arith.constant 0 : i32
    %c0_i32_0 = arith.constant 0 : i32
    %c0_i32_1 = arith.constant 0 : i32
    return %c0_i32, %c0_i32_0 : i32, i32
  }
  func.func @transform_4(%arg0: i32) -> (i32, i32) {
    %c0_i32 = arith.constant 0 : i32
    %c0_i32_0 = arith.constant 0 : i32
    %c0_i32_1 = arith.constant 0 : i32
    return %c0_i32, %c0_i32_0 : i32, i32
  }
  func.func @transform_5(%arg0: i32) -> (i32, i32) {
    %c0_i32 = arith.constant 0 : i32
    %c0_i32_0 = arith.constant 0 : i32
    %c0_i32_1 = arith.constant 0 : i32
    return %c0_i32, %c0_i32_0 : i32, i32
  }
  func.func @transform_6(%arg0: i32) -> (i32, i32) {
    %c0_i32 = arith.constant 0 : i32
    %c0_i32_0 = arith.constant 0 : i32
    %c0_i32_1 = arith.constant 0 : i32
    return %c0_i32, %c0_i32_0 : i32, i32
  }
  func.func @transform_7(%arg0: i32) -> (i32, i32) {
    %c0_i32 = arith.constant 0 : i32
    %c0_i32_0 = arith.constant 0 : i32
    return %arg0, %c0_i32 : i32, i32
  }
}

</mosaic_0001>

<llo_original>
// kernel: tpu_custom_call.1
$region0: #{tpu_custom_call.1}
  #allocation0 [shape = 'u32[]', space=smem, size = 0x4, offset = 0x4, fixed_abs, tag = 'smem constant byte address 0x4 - core index']
  #allocation1 [shape = 'u32[144,128]{1,0:T(1,128)}', space=vmem, size = 0x12000, scoped, tag = 'internal scratch']
  #allocation2 [shape = 'f32[1,1]{1,0:T(1,128)S(1)}', space=vmem, size = 0x200, scoped, tag = 'scoped memory for tpu_custom_call.1']
  %s0 = inlined_call_operand.vmem [shape: f32[8,32], index: 0, kind: input, shape index: {}]
  %s1 = inlined_call_operand.vmem [shape: bf16[32,64], index: 1, kind: input, shape index: {}]
  %s2 = inlined_call_operand.vmem [shape: f32[1,64], index: 2, kind: input, shape index: {}]
  %s3 = inlined_call_operand.vmem [shape: bf16[64,32], index: 3, kind: input, shape index: {}]
  %s4 = inlined_call_operand.vmem [shape: f32[1,32], index: 4, kind: input, shape index: {}]
  %s5 = inlined_call_operand.vmem [shape: f32[1,32], index: 5, kind: input, shape index: {}]
  %s6 = inlined_call_operand.<no memory space> [shape: f32[1,1], index: 6, kind: input, shape index: {}]
  %s7 = inlined_call_operand.vmem [shape: f32[8,1], index: 7, kind: output, shape index: {}]
  %s8 = sld [smem:[#allocation0]]
  $region38: #{tpu_custom_call.1} parent=0
    _
  %s10 = ssub.s32 1, %s8
  %s11 = scalar_select 0, %s10, %s8
  %v12 = vstv %s6
  %13 = vst [vmem:[#allocation2] sm:$0x1] %v12
  // Predicated region
  $region2: #{tpu_custom_call.1} parent=0 // pred_check
    _
  $region3: #{tpu_custom_call.1} parent=0 // pred_check_branch
    %15 = sbr.rel (0) target = $region5
  $region4: #{tpu_custom_call.1} parent=0 // pred_region
    _
  $region5: #{tpu_custom_call.1} parent=0 // pred_fallthru
    _
  // Predicated region
  $region6: #{tpu_custom_call.1} parent=0 // pred_check
    _
  $region7: #{tpu_custom_call.1} parent=0 // pred_check_branch
    %17 = sbr.rel (0) target = $region9
  $region8: #{tpu_custom_call.1} parent=0 // pred_region
    _
  $region9: #{tpu_custom_call.1} parent=0 // pred_fallthru
    _
  // Predicated region
  $region10: #{tpu_custom_call.1} parent=0 // pred_check
    _
  $region11: #{tpu_custom_call.1} parent=0 // pred_check_branch
    %19 = sbr.rel (0) target = $region13
  $region12: #{tpu_custom_call.1} parent=0 // pred_region
    _
  $region13: #{tpu_custom_call.1} parent=0 // pred_fallthru
    _
  // Predicated region
  $region14: #{tpu_custom_call.1} parent=0 // pred_check
    _
  $region15: #{tpu_custom_call.1} parent=0 // pred_check_branch
    %21 = sbr.rel (0) target = $region17
  $region16: #{tpu_custom_call.1} parent=0 // pred_region
    _
  $region17: #{tpu_custom_call.1} parent=0 // pred_fallthru
    _
  // Predicated region
  $region18: #{tpu_custom_call.1} parent=0 // pred_check
    _
  $region19: #{tpu_custom_call.1} parent=0 // pred_check_branch
    %23 = sbr.rel (0) target = $region21
  $region20: #{tpu_custom_call.1} parent=0 // pred_region
    _
  $region21: #{tpu_custom_call.1} parent=0 // pred_fallthru
    _
  // Predicated region
  $region22: #{tpu_custom_call.1} parent=0 // pred_check
    _
  $region23: #{tpu_custom_call.1} parent=0 // pred_check_branch
    %25 = sbr.rel (0) target = $region25
  $region24: #{tpu_custom_call.1} parent=0 // pred_region
    _
  $region25: #{tpu_custom_call.1} parent=0 // pred_fallthru
    _
  // Predicated region
  $region26: #{tpu_custom_call.1} parent=0 // pred_check
    _
  $region27: #{tpu_custom_call.1} parent=0 // pred_check_branch
    %27 = sbr.rel (0) target = $region29
  $region28: #{tpu_custom_call.1} parent=0 // pred_region
    _
  $region29: #{tpu_custom_call.1} parent=0 // pred_fallthru
    _
  %v29 = vld [vmem:[%s0] sm:$0xff]
  %v30 = vpack.c.bf16 %v29, %v29
  %v31 = vld [vmem:[%s1] sm:$0xf]
  %v32 = vld [vmem:[%s1 + $0x4] sm:$0xf]
  %v33 = vld [vmem:[%s1 + $0x8] sm:$0xf]
  %v34 = vld [vmem:[%s1 + $0xc] sm:$0xf]
  %v35 = vld [vmem:[%s2] sm:$0x1]
  %v37 = vlaneseq
  %v38 = vshrl.u32 %v37, 7
  %v39 = vsub.s32 0, %v38
  %v40 = vrot.slane %v35, %v39
  %v46 = vunpack.c.l.b16 %v31
  %v47 = vunpack.c.l.b16 %v32
  %v48 = vunpack.c.l.b16 %v33
  %v49 = vunpack.c.l.b16 %v34
  %v50 = vpack.c.b16 %v47, %v46
  %v51 = vpack.c.b16 %v49, %v48
  %vm54 = vcmask 261120
  %v56 = vsel %vm54, %v30, 0
  %58 = vmatprep.subr.bf16.mxu0 0
  %59 = vmatpush1.bf16.msra.mxu0 %v50
  %60 = vmatprep.subr.bf16.mxu0 0
  %61 = vmatpush1.bf16.msra.mxu0 %v51
  %62 = vmatprep.subr.bf16.mxu0 0
  %63 = vmatpush1.bf16.msra.mxu0 0
  %64 = vmatprep.subr.bf16.mxu0 0
  %65 = vmatpush1.bf16.msra.mxu0 0
  %66 = vmatprep.subr.bf16.mxu0 0
  %67 = vmatpush1.bf16.msra.mxu0 0
  %68 = vmatprep.subr.bf16.mxu0 0
  %69 = vmatpush1.bf16.msra.mxu0 0
  %70 = vmatprep.subr.bf16.mxu0 0
  %71 = vmatpush1.bf16.msra.mxu0 0
  %72 = vmatprep.subr.bf16.mxu0 0
  %73 = vmatpush1.bf16.msra.mxu0 0
  %74 = vmatprep.subr.bf16.mxu0 0
  %75 = vmatpush1.bf16.msra.mxu0 0
  %76 = vmatprep.subr.bf16.mxu0 0
  %77 = vmatpush1.bf16.msra.mxu0 0
  %78 = vmatprep.subr.bf16.mxu0 0
  %79 = vmatpush1.bf16.msra.mxu0 0
  %80 = vmatprep.subr.bf16.mxu0 0
  %81 = vmatpush1.bf16.msra.mxu0 0
  %82 = vmatprep.subr.bf16.mxu0 0
  %83 = vmatpush1.bf16.msra.mxu0 0
  %84 = vmatprep.subr.bf16.mxu0 0
  %85 = vmatpush1.bf16.msra.mxu0 0
  %86 = vmatprep.subr.bf16.mxu0 0
  %87 = vmatpush1.bf16.msra.mxu0 0
  %88 = vmatprep.subr.bf16.mxu0 0
  %89 = vmatpush1.bf16.msra.mxu0 0
  %90 = vmatprep.mubr.bf16.mxu0 0
  %91 = vmatmul.mubr.bf16.gmra.mrb[0].mxu0 %v56
  %v92 = vpop.f32.mrb[0].mxu0
  %v93 = vadd.f32 %v40, %v92
  %v94 = vpop.f32.mrb[0].mxu0
  %v95 = vpop.f32.mrb[0].mxu0
  %v96 = vpop.f32.mrb[0].mxu0
  %97 = vdwg.mxu0
  %v98 = vmax.f32 %v93, 0.0
  %v99 = vpack.c.bf16 %v98, %v98
  %v100 = vld [vmem:[%s3] sm:$0xf]
  %v101 = vld [vmem:[%s3 + $0x4] sm:$0xf]
  %v102 = vld [vmem:[%s3 + $0x8] sm:$0xf]
  %v103 = vld [vmem:[%s3 + $0xc] sm:$0xf]
  %v104 = vld [vmem:[%s3 + $0x10] sm:$0xf]
  %v105 = vld [vmem:[%s3 + $0x14] sm:$0xf]
  %v106 = vld [vmem:[%s3 + $0x18] sm:$0xf]
  %v107 = vld [vmem:[%s3 + $0x1c] sm:$0xf]
  %v108 = vld [vmem:[%s4] sm:$0x1]
  %v110 = vlaneseq
  %v111 = vshrl.u32 %v110, 7
  %v112 = vsub.s32 0, %v111
  %v113 = vrot.slane %v108, %v112
  %v123 = vunpack.c.l.b16 %v100
  %v124 = vunpack.c.l.b16 %v101
  %v125 = vunpack.c.l.b16 %v102
  %v126 = vunpack.c.l.b16 %v103
  %v127 = vunpack.c.l.b16 %v104
  %v128 = vunpack.c.l.b16 %v105
  %v129 = vunpack.c.l.b16 %v106
  %v130 = vunpack.c.l.b16 %v107
  %v131 = vpack.c.b16 %v124, %v123
  %v132 = vpack.c.b16 %v126, %v125
  %v133 = vpack.c.b16 %v128, %v127
  %v134 = vpack.c.b16 %v130, %v129
  %vm139 = vcmask 523264
  %v141 = vsel %vm139, %v99, 0
  %143 = vmatprep.subr.bf16.mxu0 0
  %144 = vmatpush1.bf16.msra.mxu0 %v131
  %145 = vmatprep.subr.bf16.mxu0 0
  %146 = vmatpush1.bf16.msra.mxu0 %v132
  %147 = vmatprep.subr.bf16.mxu0 0
  %148 = vmatpush1.bf16.msra.mxu0 %v133
  %149 = vmatprep.subr.bf16.mxu0 0
  %150 = vmatpush1.bf16.msra.mxu0 %v134
  %151 = vmatprep.subr.bf16.mxu0 0
  %152 = vmatpush1.bf16.msra.mxu0 0
  %153 = vmatprep.subr.bf16.mxu0 0
  %154 = vmatpush1.bf16.msra.mxu0 0
  %155 = vmatprep.subr.bf16.mxu0 0
  %156 = vmatpush1.bf16.msra.mxu0 0
  %157 = vmatprep.subr.bf16.mxu0 0
  %158 = vmatpush1.bf16.msra.mxu0 0
  %159 = vmatprep.subr.bf16.mxu0 0
  %160 = vmatpush1.bf16.msra.mxu0 0
  %161 = vmatprep.subr.bf16.mxu0 0
  %162 = vmatpush1.bf16.msra.mxu0 0
  %163 = vmatprep.subr.bf16.mxu0 0
  %164 = vmatpush1.bf16.msra.mxu0 0
  %165 = vmatprep.subr.bf16.mxu0 0
  %166 = vmatpush1.bf16.msra.mxu0 0
  %167 = vmatprep.subr.bf16.mxu0 0
  %168 = vmatpush1.bf16.msra.mxu0 0
  %169 = vmatprep.subr.bf16.mxu0 0
  %170 = vmatpush1.bf16.msra.mxu0 0
  %171 = vmatprep.subr.bf16.mxu0 0
  %172 = vmatpush1.bf16.msra.mxu0 0
  %173 = vmatprep.subr.bf16.mxu0 0
  %174 = vmatpush1.bf16.msra.mxu0 0
  %175 = vmatprep.mubr.bf16.mxu0 0
  %176 = vmatmul.mubr.bf16.gmra.mrb[0].mxu0 %v141
  %v177 = vpop.f32.mrb[0].mxu0
  %v178 = vadd.f32 %v113, %v177
  %v179 = vpop.f32.mrb[0].mxu0
  %v180 = vpop.f32.mrb[0].mxu0
  %v181 = vpop.f32.mrb[0].mxu0
  %182 = vdwg.mxu0
  %v183 = vmax.f32 %v178, 0.0
  %v184 = vld [vmem:[%s5] sm:$0x1]
  %v186 = vlaneseq
  %v187 = vshrl.u32 %v186, 7
  %v188 = vsub.s32 0, %v187
  %v189 = vrot.slane %v184, %v188
  %v191 = vmul.f32 %v183, %v189
  %v192 = vsel %vm54, %v191, 0.0
  %193 = vadd.xlane.f32.xlu0 %v192
  %v194 = vpop.xlane.xlu0 %193
  %v195 = vld [vmem:[#allocation2] sm:$0x1]
  %v197 = vlaneseq
  %v198 = vshrl.u32 %v197, 7
  %v199 = vsub.s32 0, %v198
  %v200 = vrot.slane %v195, %v199
  %v202 = vadd.f32 %v194, %v200
  %v203 = vxor.u32 %v202, 2147483648
  %v204 = vmul.f32 %v203, 1.442695
  %v205 = vpow.pop %v204
  %v206 = vadd.f32 %v205, 1.0
  %v207 = vrcp.pop %v206
  %v208 = vmul.f32 1.0, %v207
  %vm209 = vcmask 7168
  %210 = vst.msk [vmem:[%s7] sm:$0xff] %vm209, %v208
  // Predicated region
  $region30: #{tpu_custom_call.1} parent=0 // pred_check
    _
  $region31: #{tpu_custom_call.1} parent=0 // pred_check_branch
    %212 = sbr.rel (0) target = $region33
  $region32: #{tpu_custom_call.1} parent=0 // pred_region
    _
  $region33: #{tpu_custom_call.1} parent=0 // pred_fallthru
    _
  // Predicated region
  $region34: #{tpu_custom_call.1} parent=0 // pred_check
    _
  $region35: #{tpu_custom_call.1} parent=0 // pred_check_branch
    %214 = sbr.rel (0) target = $region37
  $region36: #{tpu_custom_call.1} parent=0 // pred_region
    _
  $region37: #{tpu_custom_call.1} parent=0 // pred_fallthru
    _

</llo_original>
